<compile_context>
chip_gen: v5e
topology: v5e:2x2
jax: 0.10.0
libtpu: 0.0.40
codegen_flags: <defaults>
</compile_context>

<pallas_src>
import math
import functools

import jax
import jax.numpy as jnp
from jax.experimental import pallas as pl
from jax.experimental.pallas import tpu as pltpu


LANE = 128  # TPU lane width; feature dim is zero-padded to a multiple of this.


def encoder_layer_kernel(x_ref, mask_ref,
                         wqkv_ref, wp_ref, bp_ref,
                         g1_ref, b1_ref,
                         wfp_ref, bfp_ref,
                         wff_ref, bff_ref,
                         g2_ref, b2_ref,
                         o_ref, *, n_head, n_feat, eps):
    f32 = jnp.float32
    x = x_ref[0]         # (T, Fp); columns >= n_feat are zero
    mask = mask_ref[0]   # (T, T) additive float mask
    t, fp = x.shape

    inv_f = 1.0 / n_feat
    col_ids = jax.lax.broadcasted_iota(jnp.int32, (1, fp), 1)
    col_mask = (col_ids < n_feat).astype(f32)   # 1 on real features, 0 on padding

    def layer_norm(v_in, gamma, beta):
        # Padded columns of v_in are zero, so sum * (1/n_feat) is the true mean.
        mu = jnp.sum(v_in, axis=-1, keepdims=True) * inv_f
        diff = (v_in - mu) * col_mask           # exclude pad columns from variance
        var = jnp.sum(diff * diff, axis=-1, keepdims=True) * inv_f
        # beta is zero-padded, so padded output columns stay exactly zero.
        return diff * jax.lax.rsqrt(var + eps) * gamma + beta

    # ---------------- MultiHeadAttention ----------------
    # Fused QKV projection; 1/sqrt(d) is already folded into the q block.
    qkv = jnp.dot(x, wqkv_ref[...], preferred_element_type=f32)   # (T, 3*Fp)
    q = qkv[:, 0:fp]
    k = qkv[:, fp:2 * fp]
    v = qkv[:, 2 * fp:3 * fp]

    # Contract the feature axes directly: q @ k^T without materializing k.T.
    dn = (((1,), (1,)), ((), ()))

    if n_head == 1:
        # Full padded width is safe: padded q/k columns are zero.
        s = jax.lax.dot_general(q, k, dimension_numbers=dn,
                                preferred_element_type=f32) + mask
        s = s - jnp.max(s, axis=-1, keepdims=True)        # stable softmax
        p = jnp.exp(s)
        p = p * pl.reciprocal(jnp.sum(p, axis=-1, keepdims=True), approx=True)
        head = jnp.dot(p, v, preferred_element_type=f32)  # (T, Fp), zero pads
    else:
        # TODO(synk): upstream helper `interleave` is undefined; head merge
        # order is only validated for n_head == 1.
        d = n_feat // n_head
        outs = []
        for h in range(n_head):                           # static loop/slices
            qh = q[:, h * d:(h + 1) * d]
            kh = k[:, h * d:(h + 1) * d]
            vh = v[:, h * d:(h + 1) * d]
            s = jax.lax.dot_general(qh, kh, dimension_numbers=dn,
                                    preferred_element_type=f32) + mask
            s = s - jnp.max(s, axis=-1, keepdims=True)
            p = jnp.exp(s)
            p = p * pl.reciprocal(jnp.sum(p, axis=-1, keepdims=True), approx=True)
            outs.append(jnp.dot(p, vh, preferred_element_type=f32))
        if fp > n_feat:
            outs.append(jnp.zeros((t, fp - n_feat), f32))
        head = jnp.concatenate(outs, axis=-1)

    head = jnp.dot(head, wp_ref[...], preferred_element_type=f32) + bp_ref[...]
    # attention_dropout -> identity (eval)
    attn = layer_norm(x + head, g1_ref[...], b1_ref[...])

    # ---------------- TransformerEncoderLayer glue ----------------
    x2 = attn + x                                                   # _x + x
    # feat_proj (Linear + bias; dropout -> identity) + residual
    y = jnp.dot(x2, wfp_ref[...], preferred_element_type=f32) + bfp_ref[...] + x2
    # feed_forward: ffn_type='linear', activation='relu', dropout -> identity
    ffn = jnp.maximum(
        jnp.dot(y, wff_ref[...], preferred_element_type=f32) + bff_ref[...], 0.0)
    y2 = ffn + y
    o_ref[0] = layer_norm(y2, g2_ref[...], b2_ref[...]).astype(o_ref.dtype)


PARAM_ORDER = ("wq", "wk", "wv", "wp", "bp", "g1", "b1",
               "wfp", "bfp", "wff", "bff", "g2", "b2")


def transformer_encoder_layer(x, mask, params, *, n_head=1, eps=1e-6):
    """x: (B, T, F) batch of sequences; mask: (B, T, T) additive float mask."""
    B, T, F = x.shape
    Fp = ((F + LANE - 1) // LANE) * LANE
    pad = Fp - F
    d = F // n_head
    scale = 1.0 / math.sqrt(d)

    pad_mat = lambda w: jnp.pad(w, ((0, pad), (0, pad)))   # (F,F) -> (Fp,Fp)
    pad_row = lambda b: jnp.pad(b, ((0, 0), (0, pad)))     # (1,F) -> (1,Fp)

    # Fuse q/k/v into a single (Fp, 3*Fp) weight; fold the 1/sqrt(d) softmax
    # scale into the q block so the kernel never scales the score matrix.
    wqkv = jnp.concatenate(
        [pad_mat(params["wq"] * scale), pad_mat(params["wk"]), pad_mat(params["wv"])],
        axis=1)

    flat = [wqkv,
            pad_mat(params["wp"]), pad_row(params["bp"]),
            pad_row(params["g1"]), pad_row(params["b1"]),
            pad_mat(params["wfp"]), pad_row(params["bfp"]),
            pad_mat(params["wff"]), pad_row(params["bff"]),
            pad_row(params["g2"]), pad_row(params["b2"])]

    x_p = jnp.pad(x, ((0, 0), (0, 0), (0, pad)))           # (B, T, Fp)

    def resident(a):
        # Whole-array block with a constant index_map: fetched once, stays
        # VMEM-resident across the (parallel) batch grid.
        nd = a.ndim
        return pl.BlockSpec(a.shape, lambda b, _n=nd: (0,) * _n)

    kernel = functools.partial(encoder_layer_kernel,
                               n_head=n_head, n_feat=F, eps=eps)

    out = pl.pallas_call(
        kernel,
        out_shape=jax.ShapeDtypeStruct((B, T, Fp), x.dtype),
        grid_spec=pltpu.PrefetchScalarGridSpec(
            num_scalar_prefetch=0,
            grid=(B,),
            in_specs=[pl.BlockSpec((1, T, Fp), lambda b: (b, 0, 0)),
                      pl.BlockSpec((1, T, T), lambda b: (b, 0, 0))]
                     + [resident(a) for a in flat],
            out_specs=pl.BlockSpec((1, T, Fp), lambda b: (b, 0, 0)),
        ),
        compiler_params=pltpu.CompilerParams(
            dimension_semantics=("parallel",)),   # megacore sharding on v7x
    )(x_p, mask, *flat)
    return out[..., :F]


def reference(x, mask, p, *, n_head=1, eps=1e-6):
    """Pure-JAX single-sequence reference (matches the PyTorch eval forward)."""
    def ln(t, g, b):
        mu = t.mean(-1, keepdims=True)
        var = ((t - mu) ** 2).mean(-1, keepdims=True)
        return (t - mu) / jnp.sqrt(var + eps) * g + b

    q, k, v = x @ p["wq"], x @ p["wk"], x @ p["wv"]
    d = x.shape[-1] // n_head
    heads = []
    for h in range(n_head):
        qh, kh, vh = (t[:, h * d:(h + 1) * d] for t in (q, k, v))
        s = qh @ kh.T / math.sqrt(d) + mask
        heads.append(jax.nn.softmax(s, axis=-1) @ vh)
    head = jnp.concatenate(heads, axis=-1)
    head = head @ p["wp"] + p["bp"]
    attn = ln(x + head, p["g1"], p["b1"])
    x2 = attn + x
    y = (x2 @ p["wfp"] + p["bfp"]) + x2
    ffn = jax.nn.relu(y @ p["wff"] + p["bff"])
    y2 = ffn + y
    return ln(y2, p["g2"], p["b2"])


if __name__ == "__main__":
    B, T, F, H = 4, 8, 32, 1        # batch=4, seq=8, n_feat=32, n_head=1
    key = jax.random.PRNGKey(0)
    ks = jax.random.split(key, 12)
    w_scale = 1.0 / math.sqrt(F)

    params = {
        "wq":  jax.random.normal(ks[0], (F, F), jnp.float32) * w_scale,
        "wk":  jax.random.normal(ks[1], (F, F), jnp.float32) * w_scale,
        "wv":  jax.random.normal(ks[2], (F, F), jnp.float32) * w_scale,
        "wp":  jax.random.normal(ks[3], (F, F), jnp.float32) * w_scale,
        "bp":  jax.random.normal(ks[4], (1, F), jnp.float32) * 0.02,
        "g1":  jnp.ones((1, F), jnp.float32),
        "b1":  jnp.zeros((1, F), jnp.float32),
        "wfp": jax.random.normal(ks[5], (F, F), jnp.float32) * w_scale,
        "bfp": jax.random.normal(ks[6], (1, F), jnp.float32) * 0.02,
        "wff": jax.random.normal(ks[7], (F, F), jnp.float32) * w_scale,
        "bff": jax.random.normal(ks[8], (1, F), jnp.float32) * 0.02,
        "g2":  jnp.ones((1, F), jnp.float32),
        "b2":  jnp.zeros((1, F), jnp.float32),
    }

    x = jax.random.normal(ks[9], (B, T, F), jnp.float32)
    mask = jax.random.normal(ks[10], (B, T, T), jnp.float32) * 0.1  # additive mask

    out = transformer_encoder_layer(x, mask, params, n_head=H, eps=1e-6)
    out = jax.block_until_ready(out)

    ref = jax.vmap(lambda xb, mb: reference(xb, mb, params, n_head=H, eps=1e-6))(x, mask)
    assert out.shape == (B, T, F)
    assert bool(jnp.all(jnp.isfinite(out)))
    assert bool(jnp.allclose(out, ref, rtol=2e-3, atol=2e-3)), "mismatch vs reference"
    print("KERNEL_OK")
</pallas_src>

<mosaic_0001>
module attributes {stable_mosaic.version = 11 : i64} {
  func.func @encoder_layer_kernel(%arg0: i32, %arg1: memref<1x8x128xf32, #tpu.memory_space<vmem>>, %arg2: memref<1x8x8xf32, #tpu.memory_space<vmem>>, %arg3: memref<128x384xf32, #tpu.memory_space<vmem>>, %arg4: memref<128x128xf32, #tpu.memory_space<vmem>>, %arg5: memref<1x128xf32, #tpu.memory_space<vmem>>, %arg6: memref<1x128xf32, #tpu.memory_space<vmem>>, %arg7: memref<1x128xf32, #tpu.memory_space<vmem>>, %arg8: memref<128x128xf32, #tpu.memory_space<vmem>>, %arg9: memref<1x128xf32, #tpu.memory_space<vmem>>, %arg10: memref<128x128xf32, #tpu.memory_space<vmem>>, %arg11: memref<1x128xf32, #tpu.memory_space<vmem>>, %arg12: memref<1x128xf32, #tpu.memory_space<vmem>>, %arg13: memref<1x128xf32, #tpu.memory_space<vmem>>, %arg14: memref<1x8x128xf32, #tpu.memory_space<vmem>>) attributes {dimension_semantics = [#tpu.dimension_semantics<parallel>], iteration_bounds = array<i64: 4>, scalar_prefetch = 0 : i64, scratch_operands = 0 : i64, tpu.core_type = #tpu.core_type<tc>, window_params = [{transform_indices = @transform_0, window_bounds = array<i64: 1, 8, 128>}, {transform_indices = @transform_1, window_bounds = array<i64: 1, 8, 8>}, {pipeline_mode = #tpu.pipeline_mode<synchronous>, transform_indices = @transform_2, window_bounds = array<i64: 128, 384>}, {pipeline_mode = #tpu.pipeline_mode<synchronous>, transform_indices = @transform_3, window_bounds = array<i64: 128, 128>}, {pipeline_mode = #tpu.pipeline_mode<synchronous>, transform_indices = @transform_4, window_bounds = array<i64: 1, 128>}, {pipeline_mode = #tpu.pipeline_mode<synchronous>, transform_indices = @transform_5, window_bounds = array<i64: 1, 128>}, {pipeline_mode = #tpu.pipeline_mode<synchronous>, transform_indices = @transform_6, window_bounds = array<i64: 1, 128>}, {pipeline_mode = #tpu.pipeline_mode<synchronous>, transform_indices = @transform_7, window_bounds = array<i64: 128, 128>}, {pipeline_mode = #tpu.pipeline_mode<synchronous>, transform_indices = @transform_8, window_bounds = array<i64: 1, 128>}, {pipeline_mode = #tpu.pipeline_mode<synchronous>, transform_indices = @transform_9, window_bounds = array<i64: 128, 128>}, {pipeline_mode = #tpu.pipeline_mode<synchronous>, transform_indices = @transform_10, window_bounds = array<i64: 1, 128>}, {pipeline_mode = #tpu.pipeline_mode<synchronous>, transform_indices = @transform_11, window_bounds = array<i64: 1, 128>}, {pipeline_mode = #tpu.pipeline_mode<synchronous>, transform_indices = @transform_12, window_bounds = array<i64: 1, 128>}, {transform_indices = @transform_13, window_bounds = array<i64: 1, 8, 128>}]} {
    %c0 = arith.constant 0 : index
    %c0_0 = arith.constant 0 : index
    %c0_1 = arith.constant 0 : index
    %0 = vector.load %arg1[%c0, %c0_0, %c0_1] : memref<1x8x128xf32, #tpu.memory_space<vmem>>, vector<1x8x128xf32>
    %1 = vector.shape_cast %0 : vector<1x8x128xf32> to vector<8x128xf32>
    %c0_2 = arith.constant 0 : index
    %c0_3 = arith.constant 0 : index
    %c0_4 = arith.constant 0 : index
    %2 = vector.load %arg2[%c0_2, %c0_3, %c0_4] : memref<1x8x8xf32, #tpu.memory_space<vmem>>, vector<1x8x8xf32>
    %3 = vector.shape_cast %2 : vector<1x8x8xf32> to vector<8x8xf32>
    %4 = tpu.iota {dimensions = array<i32: 1>} : vector<1x128xi32>
    %c32_i32 = arith.constant 32 : i32
    %5 = vector.broadcast %c32_i32 : i32 to vector<1x128xi32>
    %6 = arith.cmpi slt, %4, %5 : vector<1x128xi32>
    %7 = arith.extui %6 : vector<1x128xi1> to vector<1x128xi32>
    %8 = arith.sitofp %7 : vector<1x128xi32> to vector<1x128xf32>
    %c0_5 = arith.constant 0 : index
    %c0_6 = arith.constant 0 : index
    %9 = vector.load %arg3[%c0_5, %c0_6] : memref<128x384xf32, #tpu.memory_space<vmem>>, vector<128x384xf32>
    %cst = arith.constant dense<0.000000e+00> : vector<8x384xf32>
    %10 = tpu.matmul %1, %9, %cst {dimension_numbers = #tpu.dot_dimension_numbers<[1], [0], [0], [1], [0, 0, 1, 1], [], []>} : vector<8x128xf32>, vector<128x384xf32>, vector<8x384xf32> -> vector<8x384xf32>
    %11 = vector.extract_strided_slice %10 {offsets = [0, 0], sizes = [8, 128], strides = [1, 1]} : vector<8x384xf32> to vector<8x128xf32>
    %12 = vector.extract_strided_slice %10 {offsets = [0, 128], sizes = [8, 128], strides = [1, 1]} : vector<8x384xf32> to vector<8x128xf32>
    %13 = vector.extract_strided_slice %10 {offsets = [0, 256], sizes = [8, 128], strides = [1, 1]} : vector<8x384xf32> to vector<8x128xf32>
    %cst_7 = arith.constant dense<0.000000e+00> : vector<8x8xf32>
    %14 = tpu.matmul %11, %12, %cst_7 {dimension_numbers = #tpu.dot_dimension_numbers<[1], [1], [0], [0], [0, 0, 1, 0], [], []>} : vector<8x128xf32>, vector<8x128xf32>, vector<8x8xf32> -> vector<8x8xf32>
    %15 = arith.addf %14, %3 : vector<8x8xf32>
    %cst_8 = arith.constant dense<0xFF800000> : vector<8xf32>
    %16 = vector.multi_reduction <maximumf>, %15, %cst_8 [1] : vector<8x8xf32> to vector<8xf32>
    %17 = vector.shape_cast %16 : vector<8xf32> to vector<8x1xf32>
    %18 = vector.broadcast %17 : vector<8x1xf32> to vector<8x8xf32>
    %19 = arith.subf %15, %18 : vector<8x8xf32>
    %20 = math.exp %19 : vector<8x8xf32>
    %cst_9 = arith.constant dense<0.000000e+00> : vector<8xf32>
    %21 = vector.multi_reduction <add>, %20, %cst_9 [1] : vector<8x8xf32> to vector<8xf32>
    %22 = vector.shape_cast %21 : vector<8xf32> to vector<8x1xf32>
    %23 = tpu.reciprocal %22 {approx = true} : vector<8x1xf32> -> vector<8x1xf32>
    %24 = vector.broadcast %23 : vector<8x1xf32> to vector<8x8xf32>
    %25 = arith.mulf %20, %24 : vector<8x8xf32>
    %cst_10 = arith.constant dense<0.000000e+00> : vector<8x128xf32>
    %26 = tpu.matmul %25, %13, %cst_10 {dimension_numbers = #tpu.dot_dimension_numbers<[1], [0], [0], [1], [0, 0, 1, 1], [], []>} : vector<8x8xf32>, vector<8x128xf32>, vector<8x128xf32> -> vector<8x128xf32>
    %c0_11 = arith.constant 0 : index
    %c0_12 = arith.constant 0 : index
    %27 = vector.load %arg4[%c0_11, %c0_12] : memref<128x128xf32, #tpu.memory_space<vmem>>, vector<128x128xf32>
    %cst_13 = arith.constant dense<0.000000e+00> : vector<8x128xf32>
    %28 = tpu.matmul %26, %27, %cst_13 {dimension_numbers = #tpu.dot_dimension_numbers<[1], [0], [0], [1], [0, 0, 1, 1], [], []>} : vector<8x128xf32>, vector<128x128xf32>, vector<8x128xf32> -> vector<8x128xf32>
    %c0_14 = arith.constant 0 : index
    %c0_15 = arith.constant 0 : index
    %29 = vector.load %arg5[%c0_14, %c0_15] : memref<1x128xf32, #tpu.memory_space<vmem>>, vector<1x128xf32>
    %30 = vector.broadcast %29 : vector<1x128xf32> to vector<8x128xf32>
    %31 = arith.addf %28, %30 : vector<8x128xf32>
    %32 = arith.addf %1, %31 : vector<8x128xf32>
    %c0_16 = arith.constant 0 : index
    %c0_17 = arith.constant 0 : index
    %33 = vector.load %arg6[%c0_16, %c0_17] : memref<1x128xf32, #tpu.memory_space<vmem>>, vector<1x128xf32>
    %c0_18 = arith.constant 0 : index
    %c0_19 = arith.constant 0 : index
    %34 = vector.load %arg7[%c0_18, %c0_19] : memref<1x128xf32, #tpu.memory_space<vmem>>, vector<1x128xf32>
    %cst_20 = arith.constant dense<0.000000e+00> : vector<8xf32>
    %35 = vector.multi_reduction <add>, %32, %cst_20 [1] : vector<8x128xf32> to vector<8xf32>
    %36 = vector.shape_cast %35 : vector<8xf32> to vector<8x1xf32>
    %cst_21 = arith.constant 3.125000e-02 : f32
    %37 = vector.broadcast %cst_21 : f32 to vector<8x1xf32>
    %38 = arith.mulf %36, %37 : vector<8x1xf32>
    %39 = vector.broadcast %38 : vector<8x1xf32> to vector<8x128xf32>
    %40 = arith.subf %32, %39 : vector<8x128xf32>
    %41 = vector.broadcast %8 : vector<1x128xf32> to vector<8x128xf32>
    %42 = arith.mulf %40, %41 : vector<8x128xf32>
    %43 = arith.mulf %42, %42 : vector<8x128xf32>
    %cst_22 = arith.constant dense<0.000000e+00> : vector<8xf32>
    %44 = vector.multi_reduction <add>, %43, %cst_22 [1] : vector<8x128xf32> to vector<8xf32>
    %45 = vector.shape_cast %44 : vector<8xf32> to vector<8x1xf32>
    %cst_23 = arith.constant 3.125000e-02 : f32
    %46 = vector.broadcast %cst_23 : f32 to vector<8x1xf32>
    %47 = arith.mulf %45, %46 : vector<8x1xf32>
    %cst_24 = arith.constant 9.99999997E-7 : f32
    %48 = vector.broadcast %cst_24 : f32 to vector<8x1xf32>
    %49 = arith.addf %47, %48 : vector<8x1xf32>
    %50 = math.rsqrt %49 : vector<8x1xf32>
    %51 = vector.broadcast %50 : vector<8x1xf32> to vector<8x128xf32>
    %52 = arith.mulf %42, %51 : vector<8x128xf32>
    %53 = vector.broadcast %33 : vector<1x128xf32> to vector<8x128xf32>
    %54 = arith.mulf %52, %53 : vector<8x128xf32>
    %55 = vector.broadcast %34 : vector<1x128xf32> to vector<8x128xf32>
    %56 = arith.addf %54, %55 : vector<8x128xf32>
    %57 = arith.addf %56, %1 : vector<8x128xf32>
    %c0_25 = arith.constant 0 : index
    %c0_26 = arith.constant 0 : index
    %58 = vector.load %arg8[%c0_25, %c0_26] : memref<128x128xf32, #tpu.memory_space<vmem>>, vector<128x128xf32>
    %cst_27 = arith.constant dense<0.000000e+00> : vector<8x128xf32>
    %59 = tpu.matmul %57, %58, %cst_27 {dimension_numbers = #tpu.dot_dimension_numbers<[1], [0], [0], [1], [0, 0, 1, 1], [], []>} : vector<8x128xf32>, vector<128x128xf32>, vector<8x128xf32> -> vector<8x128xf32>
    %c0_28 = arith.constant 0 : index
    %c0_29 = arith.constant 0 : index
    %60 = vector.load %arg9[%c0_28, %c0_29] : memref<1x128xf32, #tpu.memory_space<vmem>>, vector<1x128xf32>
    %61 = vector.broadcast %60 : vector<1x128xf32> to vector<8x128xf32>
    %62 = arith.addf %59, %61 : vector<8x128xf32>
    %63 = arith.addf %62, %57 : vector<8x128xf32>
    %c0_30 = arith.constant 0 : index
    %c0_31 = arith.constant 0 : index
    %64 = vector.load %arg10[%c0_30, %c0_31] : memref<128x128xf32, #tpu.memory_space<vmem>>, vector<128x128xf32>
    %cst_32 = arith.constant dense<0.000000e+00> : vector<8x128xf32>
    %65 = tpu.matmul %63, %64, %cst_32 {dimension_numbers = #tpu.dot_dimension_numbers<[1], [0], [0], [1], [0, 0, 1, 1], [], []>} : vector<8x128xf32>, vector<128x128xf32>, vector<8x128xf32> -> vector<8x128xf32>
    %c0_33 = arith.constant 0 : index
    %c0_34 = arith.constant 0 : index
    %66 = vector.load %arg11[%c0_33, %c0_34] : memref<1x128xf32, #tpu.memory_space<vmem>>, vector<1x128xf32>
    %67 = vector.broadcast %66 : vector<1x128xf32> to vector<8x128xf32>
    %68 = arith.addf %65, %67 : vector<8x128xf32>
    %cst_35 = arith.constant 0.000000e+00 : f32
    %69 = vector.broadcast %cst_35 : f32 to vector<8x128xf32>
    %70 = arith.maximumf %68, %69 : vector<8x128xf32>
    %71 = arith.addf %70, %63 : vector<8x128xf32>
    %c0_36 = arith.constant 0 : index
    %c0_37 = arith.constant 0 : index
    %72 = vector.load %arg12[%c0_36, %c0_37] : memref<1x128xf32, #tpu.memory_space<vmem>>, vector<1x128xf32>
    %c0_38 = arith.constant 0 : index
    %c0_39 = arith.constant 0 : index
    %73 = vector.load %arg13[%c0_38, %c0_39] : memref<1x128xf32, #tpu.memory_space<vmem>>, vector<1x128xf32>
    %cst_40 = arith.constant dense<0.000000e+00> : vector<8xf32>
    %74 = vector.multi_reduction <add>, %71, %cst_40 [1] : vector<8x128xf32> to vector<8xf32>
    %75 = vector.shape_cast %74 : vector<8xf32> to vector<8x1xf32>
    %cst_41 = arith.constant 3.125000e-02 : f32
    %76 = vector.broadcast %cst_41 : f32 to vector<8x1xf32>
    %77 = arith.mulf %75, %76 : vector<8x1xf32>
    %78 = vector.broadcast %77 : vector<8x1xf32> to vector<8x128xf32>
    %79 = arith.subf %71, %78 : vector<8x128xf32>
    %80 = vector.broadcast %8 : vector<1x128xf32> to vector<8x128xf32>
    %81 = arith.mulf %79, %80 : vector<8x128xf32>
    %82 = arith.mulf %81, %81 : vector<8x128xf32>
    %cst_42 = arith.constant dense<0.000000e+00> : vector<8xf32>
    %83 = vector.multi_reduction <add>, %82, %cst_42 [1] : vector<8x128xf32> to vector<8xf32>
    %84 = vector.shape_cast %83 : vector<8xf32> to vector<8x1xf32>
    %cst_43 = arith.constant 3.125000e-02 : f32
    %85 = vector.broadcast %cst_43 : f32 to vector<8x1xf32>
    %86 = arith.mulf %84, %85 : vector<8x1xf32>
    %cst_44 = arith.constant 9.99999997E-7 : f32
    %87 = vector.broadcast %cst_44 : f32 to vector<8x1xf32>
    %88 = arith.addf %86, %87 : vector<8x1xf32>
    %89 = math.rsqrt %88 : vector<8x1xf32>
    %90 = vector.broadcast %89 : vector<8x1xf32> to vector<8x128xf32>
    %91 = arith.mulf %81, %90 : vector<8x128xf32>
    %92 = vector.broadcast %72 : vector<1x128xf32> to vector<8x128xf32>
    %93 = arith.mulf %91, %92 : vector<8x128xf32>
    %94 = vector.broadcast %73 : vector<1x128xf32> to vector<8x128xf32>
    %95 = arith.addf %93, %94 : vector<8x128xf32>
    %c0_45 = arith.constant 0 : index
    %c0_46 = arith.constant 0 : index
    %c0_47 = arith.constant 0 : index
    %96 = vector.load %arg14[%c0_45, %c0_46, %c0_47] : memref<1x8x128xf32, #tpu.memory_space<vmem>>, vector<1x8x128xf32>
    %97 = vector.shape_cast %96 : vector<1x8x128xf32> to vector<8x128xf32>
    %98 = vector.shape_cast %95 : vector<8x128xf32> to vector<1x8x128xf32>
    tpu.vector_store %arg14[%c0_45, %c0_46, %c0_47], %98 {strides = array<i32>} : memref<1x8x128xf32, #tpu.memory_space<vmem>>, vector<1x8x128xf32>,
    return
  }
  func.func @transform_0(%arg0: i32) -> (i32, i32, i32) {
    %c0_i32 = arith.constant 0 : i32
    %c0_i32_0 = arith.constant 0 : i32
    %c0_i32_1 = arith.constant 0 : i32
    return %arg0, %c0_i32, %c0_i32_0 : i32, i32, i32
  }
  func.func @transform_1(%arg0: i32) -> (i32, i32, i32) {
    %c0_i32 = arith.constant 0 : i32
    %c0_i32_0 = arith.constant 0 : i32
    %c0_i32_1 = arith.constant 0 : i32
    return %arg0, %c0_i32, %c0_i32_0 : i32, i32, i32
  }
  func.func @transform_2(%arg0: i32) -> (i32, i32) {
    %c0_i32 = arith.constant 0 : i32
    %c0_i32_0 = arith.constant 0 : i32
    %c0_i32_1 = arith.constant 0 : i32
    return %c0_i32, %c0_i32_0 : i32, i32
  }
  func.func @transform_3(%arg0: i32) -> (i32, i32) {
    %c0_i32 = arith.constant 0 : i32
    %c0_i32_0 = arith.constant 0 : i32
    %c0_i32_1 = arith.constant 0 : i32
    return %c0_i32, %c0_i32_0 : i32, i32
  }
  func.func @transform_4(%arg0: i32) -> (i32, i32) {
    %c0_i32 = arith.constant 0 : i32
    %c0_i32_0 = arith.constant 0 : i32
    %c0_i32_1 = arith.constant 0 : i32
    return %c0_i32, %c0_i32_0 : i32, i32
  }
  func.func @transform_5(%arg0: i32) -> (i32, i32) {
    %c0_i32 = arith.constant 0 : i32
    %c0_i32_0 = arith.constant 0 : i32
    %c0_i32_1 = arith.constant 0 : i32
    return %c0_i32, %c0_i32_0 : i32, i32
  }
  func.func @transform_6(%arg0: i32) -> (i32, i32) {
    %c0_i32 = arith.constant 0 : i32
    %c0_i32_0 = arith.constant 0 : i32
    %c0_i32_1 = arith.constant 0 : i32
    return %c0_i32, %c0_i32_0 : i32, i32
  }
  func.func @transform_7(%arg0: i32) -> (i32, i32) {
    %c0_i32 = arith.constant 0 : i32
    %c0_i32_0 = arith.constant 0 : i32
    %c0_i32_1 = arith.constant 0 : i32
    return %c0_i32, %c0_i32_0 : i32, i32
  }
  func.func @transform_8(%arg0: i32) -> (i32, i32) {
    %c0_i32 = arith.constant 0 : i32
    %c0_i32_0 = arith.constant 0 : i32
    %c0_i32_1 = arith.constant 0 : i32
    return %c0_i32, %c0_i32_0 : i32, i32
  }
  func.func @transform_9(%arg0: i32) -> (i32, i32) {
    %c0_i32 = arith.constant 0 : i32
    %c0_i32_0 = arith.constant 0 : i32
    %c0_i32_1 = arith.constant 0 : i32
    return %c0_i32, %c0_i32_0 : i32, i32
  }
  func.func @transform_10(%arg0: i32) -> (i32, i32) {
    %c0_i32 = arith.constant 0 : i32
    %c0_i32_0 = arith.constant 0 : i32
    %c0_i32_1 = arith.constant 0 : i32
    return %c0_i32, %c0_i32_0 : i32, i32
  }
  func.func @transform_11(%arg0: i32) -> (i32, i32) {
    %c0_i32 = arith.constant 0 : i32
    %c0_i32_0 = arith.constant 0 : i32
    %c0_i32_1 = arith.constant 0 : i32
    return %c0_i32, %c0_i32_0 : i32, i32
  }
  func.func @transform_12(%arg0: i32) -> (i32, i32) {
    %c0_i32 = arith.constant 0 : i32
    %c0_i32_0 = arith.constant 0 : i32
    %c0_i32_1 = arith.constant 0 : i32
    return %c0_i32, %c0_i32_0 : i32, i32
  }
  func.func @transform_13(%arg0: i32) -> (i32, i32, i32) {
    %c0_i32 = arith.constant 0 : i32
    %c0_i32_0 = arith.constant 0 : i32
    %c0_i32_1 = arith.constant 0 : i32
    return %arg0, %c0_i32, %c0_i32_0 : i32, i32, i32
  }
}

</mosaic_0001>

<llo_original>
// kernel: tpu_custom_call.1
$region0: #{tpu_custom_call.1}
  #allocation0 [shape = 'u32[]', space=smem, size = 0x4, offset = 0x4, fixed_abs, tag = 'smem constant byte address 0x4 - core index']
  #allocation1 [shape = 'u32[72,128]{1,0:T(1,128)}', space=vmem, size = 0x9000, scoped, tag = 'internal scratch']
  %s0 = inlined_call_operand.hbm [shape: f32[4,8,128], index: 0, kind: input, shape index: {}]
  %s1 = inlined_call_operand.hbm [shape: f32[4,8,8], index: 1, kind: input, shape index: {}]
  %s2 = inlined_call_operand.hbm [shape: f32[128,384], index: 2, kind: input, shape index: {}]
  %s3 = inlined_call_operand.hbm [shape: f32[128,128], index: 3, kind: input, shape index: {}]
  %s4 = inlined_call_operand.vmem [shape: f32[1,128], index: 4, kind: input, shape index: {}]
  %s5 = inlined_call_operand.vmem [shape: f32[1,128], index: 5, kind: input, shape index: {}]
  %s6 = inlined_call_operand.vmem [shape: f32[1,128], index: 6, kind: input, shape index: {}]
  %s7 = inlined_call_operand.hbm [shape: f32[128,128], index: 7, kind: input, shape index: {}]
  %s8 = inlined_call_operand.vmem [shape: f32[1,128], index: 8, kind: input, shape index: {}]
  %s9 = inlined_call_operand.hbm [shape: f32[128,128], index: 9, kind: input, shape index: {}]
  %s10 = inlined_call_operand.vmem [shape: f32[1,128], index: 10, kind: input, shape index: {}]
  %s11 = inlined_call_operand.vmem [shape: f32[1,128], index: 11, kind: input, shape index: {}]
  %s12 = inlined_call_operand.vmem [shape: f32[1,128], index: 12, kind: input, shape index: {}]
  %s13 = inlined_call_operand.hbm [shape: f32[4,8,128], index: 13, kind: output, shape index: {}]
  %s14 = sld [smem:[#allocation0]]
  $region109: #{tpu_custom_call.1} parent=0
    _
  %s16 = ssub.s32 1, %s14
  %s17 = scalar_select 0, %s16, %s14
  $region1: #{tpu_custom_call.1} parent=0
    #allocation2 [shape = 'u8[8192]{0}', space=vmem, size = 0x2000, scoped, tag = 'input window, operand 0']
    #allocation3 [shape = 's32[2]{0}', space=sflag, size = 0x8, scoped, tag = 'scoped memory for tpu_custom_call.1']
    #allocation4 [shape = 's32[2]{0}', space=sflag, size = 0x8, scoped, tag = 'scoped memory for tpu_custom_call.1']
    #allocation5 [shape = 'u8[8192]{0}', space=vmem, size = 0x2000, scoped, tag = 'input window, operand 1']
    #allocation6 [shape = 's32[2]{0}', space=sflag, size = 0x8, scoped, tag = 'scoped memory for tpu_custom_call.1']
    #allocation7 [shape = 'u8[196608]{0}', space=vmem, size = 0x30000, scoped, tag = 'input window, operand 2, single buffered']
    #allocation8 [shape = 'u8[65536]{0}', space=vmem, size = 0x10000, scoped, tag = 'input window, operand 3, single buffered']
    #allocation9 [shape = 's32[1]{0}', space=sflag, size = 0x4, scoped, tag = 'scoped memory for tpu_custom_call.1']
    #allocation10 [shape = 'u8[65536]{0}', space=vmem, size = 0x10000, scoped, tag = 'input window, operand 7, single buffered']
    #allocation11 [shape = 'u8[65536]{0}', space=vmem, size = 0x10000, scoped, tag = 'input window, operand 9, single buffered']
    #allocation12 [shape = 's32[1]{0}', space=sflag, size = 0x4, scoped, tag = 'scoped memory for tpu_custom_call.1']
    #allocation13 [shape = 'u8[8192]{0}', space=vmem, size = 0x2000, scoped, tag = 'output window, operand 0']
    %18 = vsyncpa [#allocation3], 0
    %s19 = scalar_lea.sflag [#allocation3], 1
    %20 = vsyncpa %s19, 0
    %21 = vsyncpa [#allocation6], 0
    %s22 = scalar_lea.sflag [#allocation6], 1
    %23 = vsyncpa %s22, 0
    %24 = vsyncpa [#allocation9], 0
    %25 = vsyncpa [#allocation12], 0
    %26 = vsyncpa [#allocation4], 0
    %s27 = scalar_lea.sflag [#allocation4], 1
    %28 = vsyncpa %s27, 0
    loop: start=0, step=1, limit=6
    $region2: #{tpu_custom_call.1} parent=1 // loop_pre_header
      _
    $region3: #{tpu_custom_call.1} parent=1 // loop_header
      %s30 = sphi 0, %s34
      %p31 = scmp.ge.s32.totalorder %s30, 6
      %s40 = sphi 0, %s42
      %s43 = sphi 0, %s40
      %s44 = sphi 0, %s43
      %s60 = sphi 0, %s44
      %s66 = sphi 0, %s68
      %s69 = sphi 0, %s66
      %s70 = sphi 0, %s69
      %s86 = sphi 0, %s70
      %s90 = sphi 0, %s90
      %s92 = sphi 0, %s90
      %s93 = sphi 0, %s92
      %s107 = sphi 0, %s93
      %s111 = sphi 0, %s111
      %s113 = sphi 0, %s111
      %s114 = sphi 0, %s113
      %s128 = sphi 0, %s114
      %s132 = sphi 0, %s132
      %s134 = sphi 0, %s132
      %s135 = sphi 0, %s134
      %s149 = sphi 0, %s135
      %s153 = sphi 0, %s153
      %s155 = sphi 0, %s153
      %s156 = sphi 0, %s155
      %s170 = sphi 0, %s156
      %s174 = sphi 0, %s174
      %s176 = sphi 0, %s174
      %s177 = sphi 0, %s176
      %s191 = sphi 0, %s177
      %s195 = sphi 0, %s195
      %s197 = sphi 0, %s195
      %s198 = sphi 0, %s197
      %s212 = sphi 0, %s198
      %s216 = sphi 0, %s216
      %s218 = sphi 0, %s216
      %s219 = sphi 0, %s218
      %s233 = sphi 0, %s219
      %s237 = sphi 0, %s237
      %s239 = sphi 0, %s237
      %s240 = sphi 0, %s239
      %s254 = sphi 0, %s240
      %s258 = sphi 0, %s258
      %s260 = sphi 0, %s258
      %s261 = sphi 0, %s260
      %s275 = sphi 0, %s261
      %s279 = sphi 0, %s279
      %s281 = sphi 0, %s279
      %s282 = sphi 0, %s281
      %s296 = sphi 0, %s282
      %s300 = sphi 0, %s300
      %s302 = sphi 0, %s300
      %s303 = sphi 0, %s302
      %s317 = sphi 0, %s303
      %s323 = sphi 0, %s325
      %s326 = sphi 0, %s323
      %s327 = sphi 0, %s326
      %s343 = sphi 0, %s327
    $region4: #{tpu_custom_call.1} parent=1 // loop_header_branch
      %33 = sbr.rel (%p31) target = $region8
    $region5: #{tpu_custom_call.1} parent=1 // loop_body
      %s35 = ssub.s32 %s30, 1
      %s36 = ssub.s32 %s30, 2
      %s37 = sadd.s32 %s30, 1
      %s38 = ssub.s32 %s30, %s37
      %p39 = scmp.eq.s32.totalorder %s38, 0
      %s41 = sadd.s32 %s40, 1
      %s42 = scalar_select %p39, %s40, %s41
      %p45 = pneg %p39
      %p46 = scmp.eq.s32.totalorder %s30, 3
      %p47 = por %p45, %p46
      %p48 = scmp.ne.s32.totalorder %s40, %s43
      %p49 = scmp.eq.s32.totalorder %s30, 0
      %p50 = por %p48, %p49
      %p51 = scmp.ne.s32.totalorder %s40, %s43
      %p52 = scmp.eq.s32.totalorder %s35, 3
      %p53 = por %p51, %p52
      %p54 = scmp.ne.s32.totalorder %s43, %s44
      %p55 = scmp.eq.s32.totalorder %s35, 0
      %p56 = por %p54, %p55
      %p57 = scmp.ne.s32.totalorder %s43, %s44
      %p58 = scmp.eq.s32.totalorder %s36, 3
      %p59 = por %p57, %p58
      %p61 = scmp.ne.s32.totalorder %s44, %s60
      %p62 = scmp.eq.s32.totalorder %s36, 0
      %p63 = por %p61, %p62
      %s64 = ssub.s32 %s30, %s37
      %p65 = scmp.eq.s32.totalorder %s64, 0
      %s67 = sadd.s32 %s66, 1
      %s68 = scalar_select %p65, %s66, %s67
      %p71 = pneg %p65
      %p72 = scmp.eq.s32.totalorder %s30, 3
      %p73 = por %p71, %p72
      %p74 = scmp.ne.s32.totalorder %s66, %s69
      %p75 = scmp.eq.s32.totalorder %s30, 0
      %p76 = por %p74, %p75
      %p77 = scmp.ne.s32.totalorder %s66, %s69
      %p78 = scmp.eq.s32.totalorder %s35, 3
      %p79 = por %p77, %p78
      %p80 = scmp.ne.s32.totalorder %s69, %s70
      %p81 = scmp.eq.s32.totalorder %s35, 0
      %p82 = por %p80, %p81
      %p83 = scmp.ne.s32.totalorder %s69, %s70
      %p84 = scmp.eq.s32.totalorder %s36, 3
      %p85 = por %p83, %p84
      %p87 = scmp.ne.s32.totalorder %s70, %s86
      %p88 = scmp.eq.s32.totalorder %s36, 0
      %p89 = por %p87, %p88
      %s91 = sadd.s32 %s90, 1
      %p94 = scmp.eq.s32.totalorder %s30, 3
      %p95 = scmp.ne.s32.totalorder %s90, %s92
      %p96 = scmp.eq.s32.totalorder %s30, 0
      %p97 = por %p95, %p96
      %p98 = scmp.ne.s32.totalorder %s90, %s92
      %p99 = scmp.eq.s32.totalorder %s35, 3
      %p100 = por %p98, %p99
      %p101 = scmp.ne.s32.totalorder %s92, %s93
      %p102 = scmp.eq.s32.totalorder %s35, 0
      %p103 = por %p101, %p102
      %p104 = scmp.ne.s32.totalorder %s92, %s93
      %p105 = scmp.eq.s32.totalorder %s36, 3
      %p106 = por %p104, %p105
      %p108 = scmp.ne.s32.totalorder %s93, %s107
      %p109 = scmp.eq.s32.totalorder %s36, 0
      %p110 = por %p108, %p109
      %s112 = sadd.s32 %s111, 1
      %p115 = scmp.eq.s32.totalorder %s30, 3
      %p116 = scmp.ne.s32.totalorder %s111, %s113
      %p117 = scmp.eq.s32.totalorder %s30, 0
      %p118 = por %p116, %p117
      %p119 = scmp.ne.s32.totalorder %s111, %s113
      %p120 = scmp.eq.s32.totalorder %s35, 3
      %p121 = por %p119, %p120
      %p122 = scmp.ne.s32.totalorder %s113, %s114
      %p123 = scmp.eq.s32.totalorder %s35, 0
      %p124 = por %p122, %p123
      %p125 = scmp.ne.s32.totalorder %s113, %s114
      %p126 = scmp.eq.s32.totalorder %s36, 3
      %p127 = por %p125, %p126
      %p129 = scmp.ne.s32.totalorder %s114, %s128
      %p130 = scmp.eq.s32.totalorder %s36, 0
      %p131 = por %p129, %p130
      %s133 = sadd.s32 %s132, 1
      %p136 = scmp.eq.s32.totalorder %s30, 3
      %p137 = scmp.ne.s32.totalorder %s132, %s134
      %p138 = scmp.eq.s32.totalorder %s30, 0
      %p139 = por %p137, %p138
      %p140 = scmp.ne.s32.totalorder %s132, %s134
      %p141 = scmp.eq.s32.totalorder %s35, 3
      %p142 = por %p140, %p141
      %p143 = scmp.ne.s32.totalorder %s134, %s135
      %p144 = scmp.eq.s32.totalorder %s35, 0
      %p145 = por %p143, %p144
      %p146 = scmp.ne.s32.totalorder %s134, %s135
      %p147 = scmp.eq.s32.totalorder %s36, 3
      %p148 = por %p146, %p147
      %p150 = scmp.ne.s32.totalorder %s135, %s149
      %p151 = scmp.eq.s32.totalorder %s36, 0
      %p152 = por %p150, %p151
      %s154 = sadd.s32 %s153, 1
      %p157 = scmp.eq.s32.totalorder %s30, 3
      %p158 = scmp.ne.s32.totalorder %s153, %s155
      %p159 = scmp.eq.s32.totalorder %s30, 0
      %p160 = por %p158, %p159
      %p161 = scmp.ne.s32.totalorder %s153, %s155
      %p162 = scmp.eq.s32.totalorder %s35, 3
      %p163 = por %p161, %p162
      %p164 = scmp.ne.s32.totalorder %s155, %s156
      %p165 = scmp.eq.s32.totalorder %s35, 0
      %p166 = por %p164, %p165
      %p167 = scmp.ne.s32.totalorder %s155, %s156
      %p168 = scmp.eq.s32.totalorder %s36, 3
      %p169 = por %p167, %p168
      %p171 = scmp.ne.s32.totalorder %s156, %s170
      %p172 = scmp.eq.s32.totalorder %s36, 0
      %p173 = por %p171, %p172
      %s175 = sadd.s32 %s174, 1
      %p178 = scmp.eq.s32.totalorder %s30, 3
      %p179 = scmp.ne.s32.totalorder %s174, %s176
      %p180 = scmp.eq.s32.totalorder %s30, 0
      %p181 = por %p179, %p180
      %p182 = scmp.ne.s32.totalorder %s174, %s176
      %p183 = scmp.eq.s32.totalorder %s35, 3
      %p184 = por %p182, %p183
      %p185 = scmp.ne.s32.totalorder %s176, %s177
      %p186 = scmp.eq.s32.totalorder %s35, 0
      %p187 = por %p185, %p186
      %p188 = scmp.ne.s32.totalorder %s176, %s177
      %p189 = scmp.eq.s32.totalorder %s36, 3
      %p190 = por %p188, %p189
      %p192 = scmp.ne.s32.totalorder %s177, %s191
      %p193 = scmp.eq.s32.totalorder %s36, 0
      %p194 = por %p192, %p193
      %s196 = sadd.s32 %s195, 1
      %p199 = scmp.eq.s32.totalorder %s30, 3
      %p200 = scmp.ne.s32.totalorder %s195, %s197
      %p201 = scmp.eq.s32.totalorder %s30, 0
      %p202 = por %p200, %p201
      %p203 = scmp.ne.s32.totalorder %s195, %s197
      %p204 = scmp.eq.s32.totalorder %s35, 3
      %p205 = por %p203, %p204
      %p206 = scmp.ne.s32.totalorder %s197, %s198
      %p207 = scmp.eq.s32.totalorder %s35, 0
      %p208 = por %p206, %p207
      %p209 = scmp.ne.s32.totalorder %s197, %s198
      %p210 = scmp.eq.s32.totalorder %s36, 3
      %p211 = por %p209, %p210
      %p213 = scmp.ne.s32.totalorder %s198, %s212
      %p214 = scmp.eq.s32.totalorder %s36, 0
      %p215 = por %p213, %p214
      %s217 = sadd.s32 %s216, 1
      %p220 = scmp.eq.s32.totalorder %s30, 3
      %p221 = scmp.ne.s32.totalorder %s216, %s218
      %p222 = scmp.eq.s32.totalorder %s30, 0
      %p223 = por %p221, %p222
      %p224 = scmp.ne.s32.totalorder %s216, %s218
      %p225 = scmp.eq.s32.totalorder %s35, 3
      %p226 = por %p224, %p225
      %p227 = scmp.ne.s32.totalorder %s218, %s219
      %p228 = scmp.eq.s32.totalorder %s35, 0
      %p229 = por %p227, %p228
      %p230 = scmp.ne.s32.totalorder %s218, %s219
      %p231 = scmp.eq.s32.totalorder %s36, 3
      %p232 = por %p230, %p231
      %p234 = scmp.ne.s32.totalorder %s219, %s233
      %p235 = scmp.eq.s32.totalorder %s36, 0
      %p236 = por %p234, %p235
      %s238 = sadd.s32 %s237, 1
      %p241 = scmp.eq.s32.totalorder %s30, 3
      %p242 = scmp.ne.s32.totalorder %s237, %s239
      %p243 = scmp.eq.s32.totalorder %s30, 0
      %p244 = por %p242, %p243
      %p245 = scmp.ne.s32.totalorder %s237, %s239
      %p246 = scmp.eq.s32.totalorder %s35, 3
      %p247 = por %p245, %p246
      %p248 = scmp.ne.s32.totalorder %s239, %s240
      %p249 = scmp.eq.s32.totalorder %s35, 0
      %p250 = por %p248, %p249
      %p251 = scmp.ne.s32.totalorder %s239, %s240
      %p252 = scmp.eq.s32.totalorder %s36, 3
      %p253 = por %p251, %p252
      %p255 = scmp.ne.s32.totalorder %s240, %s254
      %p256 = scmp.eq.s32.totalorder %s36, 0
      %p257 = por %p255, %p256
      %s259 = sadd.s32 %s258, 1
      %p262 = scmp.eq.s32.totalorder %s30, 3
      %p263 = scmp.ne.s32.totalorder %s258, %s260
      %p264 = scmp.eq.s32.totalorder %s30, 0
      %p265 = por %p263, %p264
      %p266 = scmp.ne.s32.totalorder %s258, %s260
      %p267 = scmp.eq.s32.totalorder %s35, 3
      %p268 = por %p266, %p267
      %p269 = scmp.ne.s32.totalorder %s260, %s261
      %p270 = scmp.eq.s32.totalorder %s35, 0
      %p271 = por %p269, %p270
      %p272 = scmp.ne.s32.totalorder %s260, %s261
      %p273 = scmp.eq.s32.totalorder %s36, 3
      %p274 = por %p272, %p273
      %p276 = scmp.ne.s32.totalorder %s261, %s275
      %p277 = scmp.eq.s32.totalorder %s36, 0
      %p278 = por %p276, %p277
      %s280 = sadd.s32 %s279, 1
      %p283 = scmp.eq.s32.totalorder %s30, 3
      %p284 = scmp.ne.s32.totalorder %s279, %s281
      %p285 = scmp.eq.s32.totalorder %s30, 0
      %p286 = por %p284, %p285
      %p287 = scmp.ne.s32.totalorder %s279, %s281
      %p288 = scmp.eq.s32.totalorder %s35, 3
      %p289 = por %p287, %p288
      %p290 = scmp.ne.s32.totalorder %s281, %s282
      %p291 = scmp.eq.s32.totalorder %s35, 0
      %p292 = por %p290, %p291
      %p293 = scmp.ne.s32.totalorder %s281, %s282
      %p294 = scmp.eq.s32.totalorder %s36, 3
      %p295 = por %p293, %p294
      %p297 = scmp.ne.s32.totalorder %s282, %s296
      %p298 = scmp.eq.s32.totalorder %s36, 0
      %p299 = por %p297, %p298
      %s301 = sadd.s32 %s300, 1
      %p304 = scmp.eq.s32.totalorder %s30, 3
      %p305 = scmp.ne.s32.totalorder %s300, %s302
      %p306 = scmp.eq.s32.totalorder %s30, 0
      %p307 = por %p305, %p306
      %p308 = scmp.ne.s32.totalorder %s300, %s302
      %p309 = scmp.eq.s32.totalorder %s35, 3
      %p310 = por %p308, %p309
      %p311 = scmp.ne.s32.totalorder %s302, %s303
      %p312 = scmp.eq.s32.totalorder %s35, 0
      %p313 = por %p311, %p312
      %p314 = scmp.ne.s32.totalorder %s302, %s303
      %p315 = scmp.eq.s32.totalorder %s36, 3
      %p316 = por %p314, %p315
      %p318 = scmp.ne.s32.totalorder %s303, %s317
      %p319 = scmp.eq.s32.totalorder %s36, 0
      %p320 = por %p318, %p319
      %s321 = ssub.s32 %s30, %s37
      %p322 = scmp.eq.s32.totalorder %s321, 0
      %s324 = sadd.s32 %s323, 1
      %s325 = scalar_select %p322, %s323, %s324
      %p328 = pneg %p322
      %p329 = scmp.eq.s32.totalorder %s30, 3
      %p330 = por %p328, %p329
      %p331 = scmp.ne.s32.totalorder %s323, %s326
      %p332 = scmp.eq.s32.totalorder %s30, 0
      %p333 = por %p331, %p332
      %p334 = scmp.ne.s32.totalorder %s323, %s326
      %p335 = scmp.eq.s32.totalorder %s35, 3
      %p336 = por %p334, %p335
      %p337 = scmp.ne.s32.totalorder %s326, %s327
      %p338 = scmp.eq.s32.totalorder %s35, 0
      %p339 = por %p337, %p338
      %p340 = scmp.ne.s32.totalorder %s326, %s327
      %p341 = scmp.eq.s32.totalorder %s36, 3
      %p342 = por %p340, %p341
      %p344 = scmp.ne.s32.totalorder %s327, %s343
      %p345 = scmp.eq.s32.totalorder %s36, 0
      %p346 = por %p344, %p345
      %p347 = scmp.le.s32.totalorder 1, %s30
      %p348 = scmp.lt.s32.totalorder %s30, 5
      %p349 = pnand %p347, %p348
      %p350 = pneg %p349
      // Predicated region
      $region9: #{tpu_custom_call.1} parent=5 // pred_check
        _
      $region10: #{tpu_custom_call.1} parent=5 // pred_check_branch
        %352 = sbr.rel (%p349) target = $region12
      $region11: #{tpu_custom_call.1} parent=5 // pred_region
        %s353 = ssub.s32 %s30, 1
        // Predicated region
        $region13: #{tpu_custom_call.1} parent=11 // pred_check
          %p354 = pneg %p103
        $region14: #{tpu_custom_call.1} parent=11 // pred_check_branch
          %356 = sbr.rel (%p354) target = $region16
        $region15: #{tpu_custom_call.1} parent=11 // pred_region
          %358 = vsyncadd [#allocation6], 0
          %s359 = sshll.u32 %s2, 4
          %s360 = int_to_ptr.hbm [resolvable:$true] %s359
          %s361 = sshll.u32 [#allocation7], 4
          %s362 = int_to_ptr.vmem [resolvable:$true] %s361
          %367 = dma.hbm_to_vmem [thread:$0]  %s360, 6144, %s362, [#allocation6], 384, 384, 24
        $region16: #{tpu_custom_call.1} parent=11 // pred_fallthru
          _
        // Predicated region
        $region17: #{tpu_custom_call.1} parent=11 // pred_check
          %p368 = pneg %p124
        $region18: #{tpu_custom_call.1} parent=11 // pred_check_branch
          %370 = sbr.rel (%p368) target = $region20
        $region19: #{tpu_custom_call.1} parent=11 // pred_region
          %372 = vsyncadd [#allocation9], 0
          %s373 = sshll.u32 %s3, 4
          %s374 = int_to_ptr.hbm [resolvable:$true] %s373
          %s375 = sshll.u32 [#allocation8], 4
          %s376 = int_to_ptr.vmem [resolvable:$true] %s375
          %381 = dma.hbm_to_vmem [thread:$0]  %s374, 2048, %s376, [#allocation9], 128, 128, 8
        $region20: #{tpu_custom_call.1} parent=11 // pred_fallthru
          _
        // Predicated region
        $region21: #{tpu_custom_call.1} parent=11 // pred_check
          %p382 = pneg %p145
        $region22: #{tpu_custom_call.1} parent=11 // pred_check_branch
          %384 = sbr.rel (%p382) target = $region24
        $region23: #{tpu_custom_call.1} parent=11 // pred_region
          _
        $region24: #{tpu_custom_call.1} parent=11 // pred_fallthru
          _
        // Predicated region
        $region25: #{tpu_custom_call.1} parent=11 // pred_check
          %p385 = pneg %p166
        $region26: #{tpu_custom_call.1} parent=11 // pred_check_branch
          %387 = sbr.rel (%p385) target = $region28
        $region27: #{tpu_custom_call.1} parent=11 // pred_region
          _
        $region28: #{tpu_custom_call.1} parent=11 // pred_fallthru
          _
        // Predicated region
        $region29: #{tpu_custom_call.1} parent=11 // pred_check
          %p388 = pneg %p187
        $region30: #{tpu_custom_call.1} parent=11 // pred_check_branch
          %390 = sbr.rel (%p388) target = $region32
        $region31: #{tpu_custom_call.1} parent=11 // pred_region
          _
        $region32: #{tpu_custom_call.1} parent=11 // pred_fallthru
          _
        // Predicated region
        $region33: #{tpu_custom_call.1} parent=11 // pred_check
          %p391 = pneg %p208
        $region34: #{tpu_custom_call.1} parent=11 // pred_check_branch
          %393 = sbr.rel (%p391) target = $region36
        $region35: #{tpu_custom_call.1} parent=11 // pred_region
          %395 = vsyncadd [#allocation9], 0
          %s396 = sshll.u32 %s7, 4
          %s397 = int_to_ptr.hbm [resolvable:$true] %s396
          %s398 = sshll.u32 [#allocation10], 4
          %s399 = int_to_ptr.vmem [resolvable:$true] %s398
          %404 = dma.hbm_to_vmem [thread:$0]  %s397, 2048, %s399, [#allocation9], 128, 128, 8
        $region36: #{tpu_custom_call.1} parent=11 // pred_fallthru
          _
        // Predicated region
        $region37: #{tpu_custom_call.1} parent=11 // pred_check
          %p405 = pneg %p229
        $region38: #{tpu_custom_call.1} parent=11 // pred_check_branch
          %407 = sbr.rel (%p405) target = $region40
        $region39: #{tpu_custom_call.1} parent=11 // pred_region
          _
        $region40: #{tpu_custom_call.1} parent=11 // pred_fallthru
          _
        // Predicated region
        $region41: #{tpu_custom_call.1} parent=11 // pred_check
          %p408 = pneg %p250
        $region42: #{tpu_custom_call.1} parent=11 // pred_check_branch
          %410 = sbr.rel (%p408) target = $region44
        $region43: #{tpu_custom_call.1} parent=11 // pred_region
          %412 = vsyncadd [#allocation12], 0
          %s413 = sshll.u32 %s9, 4
          %s414 = int_to_ptr.hbm [resolvable:$true] %s413
          %s415 = sshll.u32 [#allocation11], 4
          %s416 = int_to_ptr.vmem [resolvable:$true] %s415
          %421 = dma.hbm_to_vmem [thread:$0]  %s414, 2048, %s416, [#allocation12], 128, 128, 8
        $region44: #{tpu_custom_call.1} parent=11 // pred_fallthru
          _
        // Predicated region
        $region45: #{tpu_custom_call.1} parent=11 // pred_check
          %p422 = pneg %p271
        $region46: #{tpu_custom_call.1} parent=11 // pred_check_branch
          %424 = sbr.rel (%p422) target = $region48
        $region47: #{tpu_custom_call.1} parent=11 // pred_region
          _
        $region48: #{tpu_custom_call.1} parent=11 // pred_fallthru
          _
        // Predicated region
        $region49: #{tpu_custom_call.1} parent=11 // pred_check
          %p425 = pneg %p292
        $region50: #{tpu_custom_call.1} parent=11 // pred_check_branch
          %427 = sbr.rel (%p425) target = $region52
        $region51: #{tpu_custom_call.1} parent=11 // pred_region
          _
        $region52: #{tpu_custom_call.1} parent=11 // pred_fallthru
          _
        // Predicated region
        $region53: #{tpu_custom_call.1} parent=11 // pred_check
          %p428 = pneg %p313
        $region54: #{tpu_custom_call.1} parent=11 // pred_check_branch
          %430 = sbr.rel (%p428) target = $region56
        $region55: #{tpu_custom_call.1} parent=11 // pred_region
          _
        $region56: #{tpu_custom_call.1} parent=11 // pred_fallthru
          _
      $region12: #{tpu_custom_call.1} parent=5 // pred_fallthru
        _
      %p431 = scmp.lt.s32.totalorder %s30, 4
      // Predicated region
      $region57: #{tpu_custom_call.1} parent=5 // pred_check
        %p432 = pneg %p431
      $region58: #{tpu_custom_call.1} parent=5 // pred_check_branch
        %434 = sbr.rel (%p432) target = $region60
      $region59: #{tpu_custom_call.1} parent=5 // pred_region
        // Predicated region
        $region61: #{tpu_custom_call.1} parent=59 // pred_check
          %p435 = pneg %p50
        $region62: #{tpu_custom_call.1} parent=59 // pred_check_branch
          %437 = sbr.rel (%p435) target = $region64
        $region63: #{tpu_custom_call.1} parent=59 // pred_region
          %s438 = sand.u32 %s40, 1
          %s439 = scalar_lea.sflag [#allocation3], %s438
          %s440 = sand.u32 %s40, 1
          %s441 = smul.addr %s440, 8
          %s442 = scalar_lea.vmem [#allocation2], %s441
          %444 = vsyncadd %s439, 0
          %s445 = smul.addr %s30, 8
          %s446 = scalar_lea.hbm %s0, %s445
          %s448 = sshll.u32 %s446, 4
          %s449 = int_to_ptr.hbm [resolvable:$true] %s448
          %s450 = sshll.u32 %s442, 4
          %s451 = int_to_ptr.vmem [resolvable:$true] %s450
          %453 = dma.hbm_to_vmem [thread:$0]  %s449, 128, %s451, %s439
        $region64: #{tpu_custom_call.1} parent=59 // pred_fallthru
          _
        // Predicated region
        $region65: #{tpu_custom_call.1} parent=59 // pred_check
          %p454 = pneg %p76
        $region66: #{tpu_custom_call.1} parent=59 // pred_check_branch
          %456 = sbr.rel (%p454) target = $region68
        $region67: #{tpu_custom_call.1} parent=59 // pred_region
          %s457 = sand.u32 %s30, 1
          %s458 = scalar_lea.sflag [#allocation6], %s457
          %s459 = sand.u32 %s66, 1
          %s460 = smul.addr %s459, 8
          %s461 = scalar_lea.vmem [#allocation5], %s460
          %463 = vsyncadd %s458, 0
          %s464 = smul.addr %s30, 8
          %s465 = scalar_lea.hbm %s1, %s464
          %s467 = sshll.u32 %s465, 4
          %s468 = int_to_ptr.hbm [resolvable:$true] %s467
          %s469 = sshll.u32 %s461, 4
          %s470 = int_to_ptr.vmem [resolvable:$true] %s469
          %472 = dma.hbm_to_vmem [thread:$0]  %s468, 128, %s470, %s458
        $region68: #{tpu_custom_call.1} parent=59 // pred_fallthru
          _
      $region60: #{tpu_custom_call.1} parent=5 // pred_fallthru
        _
      %p473 = scmp.le.s32.totalorder 1, %s30
      %p474 = scmp.lt.s32.totalorder %s30, 5
      %p475 = pnand %p473, %p474
      %p476 = pneg %p475
      // Predicated region
      $region69: #{tpu_custom_call.1} parent=5 // pred_check
        _
      $region70: #{tpu_custom_call.1} parent=5 // pred_check_branch
        %478 = sbr.rel (%p475) target = $region72
      $region71: #{tpu_custom_call.1} parent=5 // pred_region
        %s479 = ssub.s32 %s30, 1
        %s480 = sand.u32 %s43, 1
        %s481 = scalar_lea.sflag [#allocation3], %s480
        %s482 = sand.u32 %s43, 1
        %s483 = smul.addr %s482, 8
        %s484 = scalar_lea.vmem [#allocation2], %s483
        // Predicated region
        $region73: #{tpu_custom_call.1} parent=71 // pred_check
          %p485 = pneg %p56
        $region74: #{tpu_custom_call.1} parent=71 // pred_check_branch
          %487 = sbr.rel (%p485) target = $region76
        $region75: #{tpu_custom_call.1} parent=71 // pred_region
          %489 = dma.done %s481, 128
        $region76: #{tpu_custom_call.1} parent=71 // pred_fallthru
          _
        %s490 = sand.u32 %s35, 1
        %s491 = scalar_lea.sflag [#allocation6], %s490
        %s492 = sand.u32 %s69, 1
        %s493 = smul.addr %s492, 8
        %s494 = scalar_lea.vmem [#allocation5], %s493
        // Predicated region
        $region77: #{tpu_custom_call.1} parent=71 // pred_check
          %p495 = pneg %p82
        $region78: #{tpu_custom_call.1} parent=71 // pred_check_branch
          %497 = sbr.rel (%p495) target = $region80
        $region79: #{tpu_custom_call.1} parent=71 // pred_region
          %499 = dma.done %s491, 128
        $region80: #{tpu_custom_call.1} parent=71 // pred_fallthru
          _
        // Predicated region
        $region81: #{tpu_custom_call.1} parent=71 // pred_check
          %p500 = pneg %p103
        $region82: #{tpu_custom_call.1} parent=71 // pred_check_branch
          %502 = sbr.rel (%p500) target = $region84
        $region83: #{tpu_custom_call.1} parent=71 // pred_region
          %504 = dma.done [#allocation6], 6144
        $region84: #{tpu_custom_call.1} parent=71 // pred_fallthru
          _
        // Predicated region
        $region85: #{tpu_custom_call.1} parent=71 // pred_check
          %p505 = pneg %p124
        $region86: #{tpu_custom_call.1} parent=71 // pred_check_branch
          %507 = sbr.rel (%p505) target = $region88
        $region87: #{tpu_custom_call.1} parent=71 // pred_region
          %509 = dma.done [#allocation9], 2048
        $region88: #{tpu_custom_call.1} parent=71 // pred_fallthru
          _
        // Predicated region
        $region89: #{tpu_custom_call.1} parent=71 // pred_check
          %p510 = pneg %p208
        $region90: #{tpu_custom_call.1} parent=71 // pred_check_branch
          %512 = sbr.rel (%p510) target = $region92
        $region91: #{tpu_custom_call.1} parent=71 // pred_region
          %514 = dma.done [#allocation9], 2048
        $region92: #{tpu_custom_call.1} parent=71 // pred_fallthru
          _
        // Predicated region
        $region93: #{tpu_custom_call.1} parent=71 // pred_check
          %p515 = pneg %p250
        $region94: #{tpu_custom_call.1} parent=71 // pred_check_branch
          %517 = sbr.rel (%p515) target = $region96
        $region95: #{tpu_custom_call.1} parent=71 // pred_region
          %519 = dma.done [#allocation12], 2048
        $region96: #{tpu_custom_call.1} parent=71 // pred_fallthru
          _
        %s520 = sand.u32 %s43, 1
        %s521 = scalar_lea.sflag [#allocation3], %s520
        %s522 = sand.u32 %s43, 1
        %s523 = smul.addr %s522, 8
        %s524 = scalar_lea.vmem [#allocation2], %s523
        %p525 = pneg %p56
        %p526 = pneg %p53
        %s527 = sand.u32 %s35, 1
        %s528 = scalar_lea.sflag [#allocation6], %s527
        %s529 = sand.u32 %s69, 1
        %s530 = smul.addr %s529, 8
        %s531 = scalar_lea.vmem [#allocation5], %s530
        %p532 = pneg %p82
        %p533 = pneg %p79
        %p534 = pneg %p103
        %p535 = pneg %p100
        %p536 = pneg %p124
        %p537 = pneg %p121
        %p538 = pneg %p145
        %p539 = pneg %p142
        %p540 = pneg %p166
        %p541 = pneg %p163
        %p542 = pneg %p187
        %p543 = pneg %p184
        %p544 = pneg %p208
        %p545 = pneg %p205
        %p546 = pneg %p229
        %p547 = pneg %p226
        %p548 = pneg %p250
        %p549 = pneg %p247
        %p550 = pneg %p271
        %p551 = pneg %p268
        %p552 = pneg %p292
        %p553 = pneg %p289
        %p554 = pneg %p313
        %p555 = pneg %p310
        %p556 = pneg %p339
        %p557 = pneg %p336
        %s558 = sand.u32 %s326, 1
        %s559 = scalar_lea.sflag [#allocation4], %s558
        %s560 = sand.u32 %s326, 1
        %s561 = smul.addr %s560, 8
        %s562 = scalar_lea.vmem [#allocation13], %s561
        %v563 = vld [vmem:[%s484] sm:$0xff]
        %v564 = vld [vmem:[%s494] sm:$0xff]
        %v565 = vlaneseq
        %v566 = vand.u32 %v565, 127
        %vm567 = vcmp.lt.s32.totalorder %v566, 32
        %v568 = vsel %vm567, 1, 0
        %v569 = vcvt.s32.f32 %v568
        %v570 = vld [vmem:[#allocation7] sm:$0xff]
        %v571 = vld [vmem:[#allocation7 + $0x8] sm:$0xff]
        %v572 = vld [vmem:[#allocation7 + $0x10] sm:$0xff]
        %v573 = vld [vmem:[#allocation7 + $0x18] sm:$0xff]
        %v574 = vld [vmem:[#allocation7 + $0x20] sm:$0xff]
        %v575 = vld [vmem:[#allocation7 + $0x28] sm:$0xff]
        %v576 = vld [vmem:[#allocation7 + $0x30] sm:$0xff]
        %v577 = vld [vmem:[#allocation7 + $0x38] sm:$0xff]
        %v578 = vld [vmem:[#allocation7 + $0x40] sm:$0xff]
        %v579 = vld [vmem:[#allocation7 + $0x48] sm:$0xff]
        %v580 = vld [vmem:[#allocation7 + $0x50] sm:$0xff]
        %v581 = vld [vmem:[#allocation7 + $0x58] sm:$0xff]
        %v582 = vld [vmem:[#allocation7 + $0x60] sm:$0xff]
        %v583 = vld [vmem:[#allocation7 + $0x68] sm:$0xff]
        %v584 = vld [vmem:[#allocation7 + $0x70] sm:$0xff]
        %v585 = vld [vmem:[#allocation7 + $0x78] sm:$0xff]
        %v586 = vld [vmem:[#allocation7 + $0x80] sm:$0xff]
        %v587 = vld [vmem:[#allocation7 + $0x88] sm:$0xff]
        %v588 = vld [vmem:[#allocation7 + $0x90] sm:$0xff]
        %v589 = vld [vmem:[#allocation7 + $0x98] sm:$0xff]
        %v590 = vld [vmem:[#allocation7 + $0xa0] sm:$0xff]
        %v591 = vld [vmem:[#allocation7 + $0xa8] sm:$0xff]
        %v592 = vld [vmem:[#allocation7 + $0xb0] sm:$0xff]
        %v593 = vld [vmem:[#allocation7 + $0xb8] sm:$0xff]
        %v594 = vld [vmem:[#allocation7 + $0xc0] sm:$0xff]
        %v595 = vld [vmem:[#allocation7 + $0xc8] sm:$0xff]
        %v596 = vld [vmem:[#allocation7 + $0xd0] sm:$0xff]
        %v597 = vld [vmem:[#allocation7 + $0xd8] sm:$0xff]
        %v598 = vld [vmem:[#allocation7 + $0xe0] sm:$0xff]
        %v599 = vld [vmem:[#allocation7 + $0xe8] sm:$0xff]
        %v600 = vld [vmem:[#allocation7 + $0xf0] sm:$0xff]
        %v601 = vld [vmem:[#allocation7 + $0xf8] sm:$0xff]
        %v602 = vld [vmem:[#allocation7 + $0x100] sm:$0xff]
        %v603 = vld [vmem:[#allocation7 + $0x108] sm:$0xff]
        %v604 = vld [vmem:[#allocation7 + $0x110] sm:$0xff]
        %v605 = vld [vmem:[#allocation7 + $0x118] sm:$0xff]
        %v606 = vld [vmem:[#allocation7 + $0x120] sm:$0xff]
        %v607 = vld [vmem:[#allocation7 + $0x128] sm:$0xff]
        %v608 = vld [vmem:[#allocation7 + $0x130] sm:$0xff]
        %v609 = vld [vmem:[#allocation7 + $0x138] sm:$0xff]
        %v610 = vld [vmem:[#allocation7 + $0x140] sm:$0xff]
        %v611 = vld [vmem:[#allocation7 + $0x148] sm:$0xff]
        %v612 = vld [vmem:[#allocation7 + $0x150] sm:$0xff]
        %v613 = vld [vmem:[#allocation7 + $0x158] sm:$0xff]
        %v614 = vld [vmem:[#allocation7 + $0x160] sm:$0xff]
        %v615 = vld [vmem:[#allocation7 + $0x168] sm:$0xff]
        %v616 = vld [vmem:[#allocation7 + $0x170] sm:$0xff]
        %v617 = vld [vmem:[#allocation7 + $0x178] sm:$0xff]
        %618 = vmatpush.msra.mxu0 %v615
        %619 = vmatpush.msra.mxu0 %v612
        %620 = vmatpush.msra.mxu0 %v609
        %621 = vmatpush.msra.mxu0 %v606
        %622 = vmatpush.msra.mxu0 %v603
        %623 = vmatpush.msra.mxu0 %v600
        %624 = vmatpush.msra.mxu0 %v597
        %625 = vmatpush.msra.mxu0 %v594
        %626 = vmatpush.msra.mxu0 %v591
        %627 = vmatpush.msra.mxu0 %v588
        %628 = vmatpush.msra.mxu0 %v585
        %629 = vmatpush.msra.mxu0 %v582
        %630 = vmatpush.msra.mxu0 %v579
        %631 = vmatpush.msra.mxu0 %v576
        %632 = vmatpush.msra.mxu0 %v573
        %633 = vmatpush.msra.mxu0 %v570
        %634 = vmatmul.f32.gmra.mxu0 %v563
        %v635 = vpop.f32.mrf.mxu0
        %v636 = vadd.f32 0.0, %v635
        %637 = vdwg.mxu0
        %638 = vmatpush.msra.mxu0 %v616
        %639 = vmatpush.msra.mxu0 %v613
        %640 = vmatpush.msra.mxu0 %v610
        %641 = vmatpush.msra.mxu0 %v607
        %642 = vmatpush.msra.mxu0 %v604
        %643 = vmatpush.msra.mxu0 %v601
        %644 = vmatpush.msra.mxu0 %v598
        %645 = vmatpush.msra.mxu0 %v595
        %646 = vmatpush.msra.mxu0 %v592
        %647 = vmatpush.msra.mxu0 %v589
        %648 = vmatpush.msra.mxu0 %v586
        %649 = vmatpush.msra.mxu0 %v583
        %650 = vmatpush.msra.mxu0 %v580
        %651 = vmatpush.msra.mxu0 %v577
        %652 = vmatpush.msra.mxu0 %v574
        %653 = vmatpush.msra.mxu0 %v571
        %654 = vmatmul.f32.gmra.mxu0 %v563
        %v655 = vpop.f32.mrf.mxu0
        %v656 = vadd.f32 0.0, %v655
        %657 = vdwg.mxu0
        %658 = vmatpush.msra.mxu0 %v617
        %659 = vmatpush.msra.mxu0 %v614
        %660 = vmatpush.msra.mxu0 %v611
        %661 = vmatpush.msra.mxu0 %v608
        %662 = vmatpush.msra.mxu0 %v605
        %663 = vmatpush.msra.mxu0 %v602
        %664 = vmatpush.msra.mxu0 %v599
        %665 = vmatpush.msra.mxu0 %v596
        %666 = vmatpush.msra.mxu0 %v593
        %667 = vmatpush.msra.mxu0 %v590
        %668 = vmatpush.msra.mxu0 %v587
        %669 = vmatpush.msra.mxu0 %v584
        %670 = vmatpush.msra.mxu0 %v581
        %671 = vmatpush.msra.mxu0 %v578
        %672 = vmatpush.msra.mxu0 %v575
        %673 = vmatpush.msra.mxu0 %v572
        %674 = vmatmul.f32.gmra.mxu0 %v563
        %v675 = vpop.f32.mrf.mxu0
        %v676 = vadd.f32 0.0, %v675
        %677 = vdwg.mxu0
        %678 = vmatpush.xpose.msra.mxu0 0.0
        %679 = vmatpush.xpose.msra.mxu0 0.0
        %680 = vmatpush.xpose.msra.mxu0 0.0
        %681 = vmatpush.xpose.msra.mxu0 0.0
        %682 = vmatpush.xpose.msra.mxu0 0.0
        %683 = vmatpush.xpose.msra.mxu0 0.0
        %684 = vmatpush.xpose.msra.mxu0 0.0
        %685 = vmatpush.xpose.msra.mxu0 0.0
        %686 = vmatpush.xpose.msra.mxu0 0.0
        %687 = vmatpush.xpose.msra.mxu0 0.0
        %688 = vmatpush.xpose.msra.mxu0 0.0
        %689 = vmatpush.xpose.msra.mxu0 0.0
        %690 = vmatpush.xpose.msra.mxu0 0.0
        %691 = vmatpush.xpose.msra.mxu0 0.0
        %692 = vmatpush.xpose.msra.mxu0 0.0
        %693 = vmatpush.xpose.msra.mxu0 %v656
        %694 = vmatmul.f32.gmra.mxu0 %v636
        %v695 = vpop.f32.mrf.mxu0
        %v696 = vadd.f32 %v564, %v695
        %697 = vdwg.mxu0
        %vm698 = vcmask 64512
        %v699 = vsel %vm698, %v696, -inf
        %700 = vmax.xlane.f32.xlu0 %v699
        %v701 = vpop.xlane.xlu0 %700
        %v702 = vsub.f32 %v696, %v701
        %v703 = vmul.f32 %v702, 1.442695
        %v704 = vpow.pop %v703
        %v705 = vsel %vm698, %v704, 0.0
        %706 = vadd.xlane.f32.xlu0 %v705
        %v707 = vpop.xlane.xlu0 %706
        %v708 = vrcp.pop %v707
        %v709 = vmul.f32 %v704, %v708
        %v711 = vsel %vm698, %v709, 0
        %713 = vmatpush.msra.mxu0 0.0
        %714 = vmatpush.msra.mxu0 0.0
        %715 = vmatpush.msra.mxu0 0.0
        %716 = vmatpush.msra.mxu0 0.0
        %717 = vmatpush.msra.mxu0 0.0
        %718 = vmatpush.msra.mxu0 0.0
        %719 = vmatpush.msra.mxu0 0.0
        %720 = vmatpush.msra.mxu0 0.0
        %721 = vmatpush.msra.mxu0 0.0
        %722 = vmatpush.msra.mxu0 0.0
        %723 = vmatpush.msra.mxu0 0.0
        %724 = vmatpush.msra.mxu0 0.0
        %725 = vmatpush.msra.mxu0 0.0
        %726 = vmatpush.msra.mxu0 0.0
        %727 = vmatpush.msra.mxu0 0.0
        %728 = vmatpush.msra.mxu0 %v676
        %729 = vmatmul.f32.gmra.mxu0 %v711
        %v730 = vpop.f32.mrf.mxu0
        %v731 = vadd.f32 0.0, %v730
        %732 = vdwg.mxu0
        %v733 = vld [vmem:[#allocation8] sm:$0xff]
        %v734 = vld [vmem:[#allocation8 + $0x8] sm:$0xff]
        %v735 = vld [vmem:[#allocation8 + $0x10] sm:$0xff]
        %v736 = vld [vmem:[#allocation8 + $0x18] sm:$0xff]
        %v737 = vld [vmem:[#allocation8 + $0x20] sm:$0xff]
        %v738 = vld [vmem:[#allocation8 + $0x28] sm:$0xff]
        %v739 = vld [vmem:[#allocation8 + $0x30] sm:$0xff]
        %v740 = vld [vmem:[#allocation8 + $0x38] sm:$0xff]
        %v741 = vld [vmem:[#allocation8 + $0x40] sm:$0xff]
        %v742 = vld [vmem:[#allocation8 + $0x48] sm:$0xff]
        %v743 = vld [vmem:[#allocation8 + $0x50] sm:$0xff]
        %v744 = vld [vmem:[#allocation8 + $0x58] sm:$0xff]
        %v745 = vld [vmem:[#allocation8 + $0x60] sm:$0xff]
        %v746 = vld [vmem:[#allocation8 + $0x68] sm:$0xff]
        %v747 = vld [vmem:[#allocation8 + $0x70] sm:$0xff]
        %v748 = vld [vmem:[#allocation8 + $0x78] sm:$0xff]
        %v749 = vld [vmem:[%s4] sm:$0x1]
        %v751 = vperm.slane %v749, 0
        %753 = vmatpush.msra.mxu0 %v748
        %754 = vmatpush.msra.mxu0 %v747
        %755 = vmatpush.msra.mxu0 %v746
        %756 = vmatpush.msra.mxu0 %v745
        %757 = vmatpush.msra.mxu0 %v744
        %758 = vmatpush.msra.mxu0 %v743
        %759 = vmatpush.msra.mxu0 %v742
        %760 = vmatpush.msra.mxu0 %v741
        %761 = vmatpush.msra.mxu0 %v740
        %762 = vmatpush.msra.mxu0 %v739
        %763 = vmatpush.msra.mxu0 %v738
        %764 = vmatpush.msra.mxu0 %v737
        %765 = vmatpush.msra.mxu0 %v736
        %766 = vmatpush.msra.mxu0 %v735
        %767 = vmatpush.msra.mxu0 %v734
        %768 = vmatpush.msra.mxu0 %v733
        %769 = vmatmul.f32.gmra.mxu0 %v731
        %v770 = vpop.f32.mrf.mxu0
        %v771 = vadd.f32 %v751, %v770
        %772 = vdwg.mxu0
        %v773 = vadd.f32 %v563, %v771
        %v774 = vld [vmem:[%s5] sm:$0x1]
        %v775 = vld [vmem:[%s6] sm:$0x1]
        %776 = vadd.xlane.f32.xlu0 %v773
        %v777 = vpop.xlane.xlu0 %776
        %v778 = vmul.f32 %v777, 0.03125
        %v779 = vsub.f32 %v773, %v778
        %v780 = vmul.f32 %v779, %v569
        %v781 = vmul.f32 %v780, %v780
        %782 = vadd.xlane.f32.xlu0 %v781
        %v783 = vpop.xlane.xlu0 %782
        %v784 = vmul.f32 %v783, 0.03125
        %v785 = vadd.f32 %v784, 1e-06
        %v786 = vrsqrt.pop %v785
        %v787 = vmul.f32 %v786, %v785
        %v788 = vmul.f32 %v787, %v786
        %v789 = vmul.f32 0.5, %v788
        %v790 = vsub.f32 1.5, %v789
        %v791 = vmul.f32 %v786, %v790
        %vm792 = vweird.f32 %v785
        %vm793 = vweird.f32 %v786
        %vm794 = vmor %vm792, %vm793
        %v795 = vsel %vm794, %v786, %v791
        %v796 = vmul.f32 %v780, %v795
        %v798 = vperm.slane %v774, 0
        %v800 = vmul.f32 %v796, %v798
        %v802 = vperm.slane %v775, 0
        %v804 = vadd.f32 %v800, %v802
        %v805 = vadd.f32 %v804, %v563
        %v806 = vld [vmem:[#allocation10] sm:$0xff]
        %v807 = vld [vmem:[#allocation10 + $0x8] sm:$0xff]
        %v808 = vld [vmem:[#allocation10 + $0x10] sm:$0xff]
        %v809 = vld [vmem:[#allocation10 + $0x18] sm:$0xff]
        %v810 = vld [vmem:[#allocation10 + $0x20] sm:$0xff]
        %v811 = vld [vmem:[#allocation10 + $0x28] sm:$0xff]
        %v812 = vld [vmem:[#allocation10 + $0x30] sm:$0xff]
        %v813 = vld [vmem:[#allocation10 + $0x38] sm:$0xff]
        %v814 = vld [vmem:[#allocation10 + $0x40] sm:$0xff]
        %v815 = vld [vmem:[#allocation10 + $0x48] sm:$0xff]
        %v816 = vld [vmem:[#allocation10 + $0x50] sm:$0xff]
        %v817 = vld [vmem:[#allocation10 + $0x58] sm:$0xff]
        %v818 = vld [vmem:[#allocation10 + $0x60] sm:$0xff]
        %v819 = vld [vmem:[#allocation10 + $0x68] sm:$0xff]
        %v820 = vld [vmem:[#allocation10 + $0x70] sm:$0xff]
        %v821 = vld [vmem:[#allocation10 + $0x78] sm:$0xff]
        %v822 = vld [vmem:[%s8] sm:$0x1]
        %v824 = vperm.slane %v822, 0
        %826 = vmatpush.msra.mxu0 %v821
        %827 = vmatpush.msra.mxu0 %v820
        %828 = vmatpush.msra.mxu0 %v819
        %829 = vmatpush.msra.mxu0 %v818
        %830 = vmatpush.msra.mxu0 %v817
        %831 = vmatpush.msra.mxu0 %v816
        %832 = vmatpush.msra.mxu0 %v815
        %833 = vmatpush.msra.mxu0 %v814
        %834 = vmatpush.msra.mxu0 %v813
        %835 = vmatpush.msra.mxu0 %v812
        %836 = vmatpush.msra.mxu0 %v811
        %837 = vmatpush.msra.mxu0 %v810
        %838 = vmatpush.msra.mxu0 %v809
        %839 = vmatpush.msra.mxu0 %v808
        %840 = vmatpush.msra.mxu0 %v807
        %841 = vmatpush.msra.mxu0 %v806
        %842 = vmatmul.f32.gmra.mxu0 %v805
        %v843 = vpop.f32.mrf.mxu0
        %v844 = vadd.f32 %v824, %v843
        %845 = vdwg.mxu0
        %v846 = vadd.f32 %v844, %v805
        %v847 = vld [vmem:[#allocation11] sm:$0xff]
        %v848 = vld [vmem:[#allocation11 + $0x8] sm:$0xff]
        %v849 = vld [vmem:[#allocation11 + $0x10] sm:$0xff]
        %v850 = vld [vmem:[#allocation11 + $0x18] sm:$0xff]
        %v851 = vld [vmem:[#allocation11 + $0x20] sm:$0xff]
        %v852 = vld [vmem:[#allocation11 + $0x28] sm:$0xff]
        %v853 = vld [vmem:[#allocation11 + $0x30] sm:$0xff]
        %v854 = vld [vmem:[#allocation11 + $0x38] sm:$0xff]
        %v855 = vld [vmem:[#allocation11 + $0x40] sm:$0xff]
        %v856 = vld [vmem:[#allocation11 + $0x48] sm:$0xff]
        %v857 = vld [vmem:[#allocation11 + $0x50] sm:$0xff]
        %v858 = vld [vmem:[#allocation11 + $0x58] sm:$0xff]
        %v859 = vld [vmem:[#allocation11 + $0x60] sm:$0xff]
        %v860 = vld [vmem:[#allocation11 + $0x68] sm:$0xff]
        %v861 = vld [vmem:[#allocation11 + $0x70] sm:$0xff]
        %v862 = vld [vmem:[#allocation11 + $0x78] sm:$0xff]
        %v863 = vld [vmem:[%s10] sm:$0x1]
        %v865 = vperm.slane %v863, 0
        %867 = vmatpush.msra.mxu0 %v862
        %868 = vmatpush.msra.mxu0 %v861
        %869 = vmatpush.msra.mxu0 %v860
        %870 = vmatpush.msra.mxu0 %v859
        %871 = vmatpush.msra.mxu0 %v858
        %872 = vmatpush.msra.mxu0 %v857
        %873 = vmatpush.msra.mxu0 %v856
        %874 = vmatpush.msra.mxu0 %v855
        %875 = vmatpush.msra.mxu0 %v854
        %876 = vmatpush.msra.mxu0 %v853
        %877 = vmatpush.msra.mxu0 %v852
        %878 = vmatpush.msra.mxu0 %v851
        %879 = vmatpush.msra.mxu0 %v850
        %880 = vmatpush.msra.mxu0 %v849
        %881 = vmatpush.msra.mxu0 %v848
        %882 = vmatpush.msra.mxu0 %v847
        %883 = vmatmul.f32.gmra.mxu0 %v846
        %v884 = vpop.f32.mrf.mxu0
        %v885 = vadd.f32 %v865, %v884
        %886 = vdwg.mxu0
        %v887 = vmax.f32 %v885, 0.0
        %v888 = vadd.f32 %v887, %v846
        %v889 = vld [vmem:[%s11] sm:$0x1]
        %v890 = vld [vmem:[%s12] sm:$0x1]
        %891 = vadd.xlane.f32.xlu0 %v888
        %v892 = vpop.xlane.xlu0 %891
        %v893 = vmul.f32 %v892, 0.03125
        %v894 = vsub.f32 %v888, %v893
        %v895 = vmul.f32 %v894, %v569
        %v896 = vmul.f32 %v895, %v895
        %897 = vadd.xlane.f32.xlu0 %v896
        %v898 = vpop.xlane.xlu0 %897
        %v899 = vmul.f32 %v898, 0.03125
        %v900 = vadd.f32 %v899, 1e-06
        %v901 = vrsqrt.pop %v900
        %v902 = vmul.f32 %v901, %v900
        %v903 = vmul.f32 %v902, %v901
        %v904 = vmul.f32 0.5, %v903
        %v905 = vsub.f32 1.5, %v904
        %v906 = vmul.f32 %v901, %v905
        %vm907 = vweird.f32 %v900
        %vm908 = vweird.f32 %v901
        %vm909 = vmor %vm907, %vm908
        %v910 = vsel %vm909, %v901, %v906
        %v911 = vmul.f32 %v895, %v910
        %v913 = vperm.slane %v889, 0
        %v915 = vmul.f32 %v911, %v913
        %v917 = vperm.slane %v890, 0
        %v919 = vadd.f32 %v915, %v917
        %920 = vst [vmem:[%s562] sm:$0xff] %v919
        %s921 = sand.u32 %s326, 1
        %s922 = scalar_lea.sflag [#allocation4], %s921
        %s923 = sand.u32 %s326, 1
        %s924 = smul.addr %s923, 8
        %s925 = scalar_lea.vmem [#allocation13], %s924
        // Predicated region
        $region97: #{tpu_custom_call.1} parent=71 // pred_check
          %p926 = pneg %p336
        $region98: #{tpu_custom_call.1} parent=71 // pred_check_branch
          %928 = sbr.rel (%p926) target = $region100
        $region99: #{tpu_custom_call.1} parent=71 // pred_region
          %930 = vsyncadd %s922, 0
          %s931 = smul.addr %s35, 8
          %s932 = scalar_lea.hbm %s13, %s931
          %s934 = sshll.u32 %s925, 4
          %s935 = int_to_ptr.vmem [resolvable:$true] %s934
          %s936 = sshll.u32 %s932, 4
          %s937 = int_to_ptr.hbm [resolvable:$true] %s936
          %939 = dma.vmem_to_hbm [thread:$0]  %s935, 128, %s937, %s922
        $region100: #{tpu_custom_call.1} parent=71 // pred_fallthru
          _
      $region72: #{tpu_custom_call.1} parent=5 // pred_fallthru
        _
      %p940 = scmp.le.s32.totalorder 2, %s30
      // Predicated region
      $region101: #{tpu_custom_call.1} parent=5 // pred_check
        %p941 = pneg %p940
      $region102: #{tpu_custom_call.1} parent=5 // pred_check_branch
        %943 = sbr.rel (%p941) target = $region104
      $region103: #{tpu_custom_call.1} parent=5 // pred_region
        %s944 = ssub.s32 %s30, 2
        // Predicated region
        $region105: #{tpu_custom_call.1} parent=103 // pred_check
          %p945 = pneg %p342
        $region106: #{tpu_custom_call.1} parent=103 // pred_check_branch
          %947 = sbr.rel (%p945) target = $region108
        $region107: #{tpu_custom_call.1} parent=103 // pred_region
          %s948 = sand.u32 %s327, 1
          %s949 = scalar_lea.sflag [#allocation4], %s948
          %s950 = sand.u32 %s327, 1
          %s951 = smul.addr %s950, 8
          %s952 = scalar_lea.vmem [#allocation13], %s951
          %954 = dma.done %s949, 128
        $region108: #{tpu_custom_call.1} parent=103 // pred_fallthru
          _
      $region104: #{tpu_custom_call.1} parent=5 // pred_fallthru
        _
    $region6: #{tpu_custom_call.1} parent=1 // loop_footer
      %s34 = sadd.s32 1, %s30
    $region7: #{tpu_custom_call.1} parent=1 // loop_footer_branch
      %29 = sbr.rel target = $region3
    $region8: #{tpu_custom_call.1} parent=1 // loop_exit
      _
    %955 = vsyncpa [#allocation3], 1
    %s956 = scalar_lea.sflag [#allocation3], 1
    %957 = vsyncpa %s956, 1
    %958 = vsyncpa [#allocation6], 1
    %s959 = scalar_lea.sflag [#allocation6], 1
    %960 = vsyncpa %s959, 1
    %961 = vsyncpa [#allocation9], 1
    %962 = vsyncpa [#allocation12], 1
    %963 = vsyncpa [#allocation4], 1
    %s964 = scalar_lea.sflag [#allocation4], 1
    %965 = vsyncpa %s964, 1

</llo_original>
